<compile_context>
chip_gen: v7x
topology: tpu7x:2x2x1
jax: 0.10.0
libtpu: 0.0.40
codegen_flags: <defaults>
</compile_context>

<pallas_src>
import jax
import jax.numpy as jnp
from jax.experimental import pallas as pl
from jax.experimental.pallas import tpu as pltpu


# ----------------------------- kernels ------------------------------------ #

def _ffn_kernel_f32out(x_ref, w1_ref, b1_ref, w2_ref, b2_ref, o_ref, h_ref):
    """f32 output: accumulate directly into the resident output block."""
    j = pl.program_id(1)

    @pl.when(j == 0)
    def _():
        # Fold b2 into the accumulator init (no epilogue add).
        o_ref[...] = jnp.broadcast_to(b2_ref[...], o_ref.shape)

    # h_chunk = relu(x @ W1[:, chunk j] + b1[chunk j])  -- f32 MXU accumulation,
    # stored to an explicit VMEM scratch in the compute dtype.
    h = jnp.dot(x_ref[...], w1_ref[...], preferred_element_type=jnp.float32)
    h_ref[...] = jnp.maximum(h + b1_ref[...], 0.0).astype(h_ref.dtype)

    # Dropout = identity (eval mode).
    # out += h_chunk @ W2[chunk j, :]
    o_ref[...] += jnp.dot(h_ref[...], w2_ref[...],
                          preferred_element_type=jnp.float32)


def _ffn_kernel_acc(x_ref, w1_ref, b1_ref, w2_ref, b2_ref, o_ref,
                    h_ref, acc_ref):
    """Non-f32 output: f32 accumulator scratch, cast on the last d_ff chunk."""
    j = pl.program_id(1)

    @pl.when(j == 0)
    def _():
        acc_ref[...] = jnp.broadcast_to(b2_ref[...], acc_ref.shape)

    h = jnp.dot(x_ref[...], w1_ref[...], preferred_element_type=jnp.float32)
    h_ref[...] = jnp.maximum(h + b1_ref[...], 0.0).astype(h_ref.dtype)

    acc_ref[...] += jnp.dot(h_ref[...], w2_ref[...],
                            preferred_element_type=jnp.float32)

    @pl.when(j == pl.num_programs(1) - 1)
    def _():
        o_ref[...] = acc_ref[...].astype(o_ref.dtype)


# --------------------------- host-side helpers ----------------------------- #

def _round_up(x, m):
    return (x + m - 1) // m * m


def _pad2(a, rows, cols):
    pr, pc = rows - a.shape[0], cols - a.shape[1]
    if pr == 0 and pc == 0:
        return a
    return jnp.pad(a, ((0, pr), (0, pc)))


def _pad1(a, n):
    p = n - a.shape[0]
    return a if p == 0 else jnp.pad(a, (0, p))


def _vmem_budget_bytes():
    """Generation-aware usable-VMEM budget (physical capacity minus headroom)."""
    try:
        cap = int(pltpu.get_tpu_info().vmem_capacity_bytes)
    except Exception:
        cap = 128 << 20
    if cap <= (64 << 20):
        # v7x: 64 MiB per TensorCore -> leave headroom for compiler scratch.
        return max(cap - (12 << 20), 32 << 20)
    # v5e / v6e: 128 MiB physical.
    return min(cap - (16 << 20), 110 << 20)


def prepare_ffn_params(w1, b1, w2, b2, *, ff_tile=512,
                       compute_dtype=jnp.bfloat16):
    """Cast / pad / chunk the FFN weights into kernel layout ONCE.

    Do this at parameter-setup time (not per forward call) so the forward
    path never rewrites the full weight matrices.

    w1: (d_model, d_ff)  == nn.Linear(d_model, d_ff).weight.T
    w2: (d_ff, d_model)  == nn.Linear(d_ff, d_model).weight.T
    """
    d_model, d_ff = w1.shape
    cdt = jnp.dtype(compute_dtype)

    dm_p = _round_up(d_model, 128)                      # lane-dense d_model
    tff = _round_up(min(ff_tile, _round_up(d_ff, 128)), 128)
    dff_p = _round_up(d_ff, tff)

    # W1 stored as (n_ff_chunks, dm_p, tff): each d_ff chunk is one contiguous
    # HBM slab (the 2-D layout would be dm_p narrow strided segments per DMA).
    w1p = _pad2(w1.astype(cdt), dm_p, dff_p)
    w1c = w1p.reshape(dm_p, dff_p // tff, tff).transpose(1, 0, 2)
    w2p = _pad2(w2.astype(cdt), dff_p, dm_p)            # chunks already contiguous
    b1p = _pad1(b1.astype(jnp.float32), dff_p).reshape(1, dff_p)
    b2p = _pad1(b2.astype(jnp.float32), dm_p).reshape(1, dm_p)

    return dict(w1=w1c, b1=b1p, w2=w2p, b2=b2p,
                d_model=d_model, d_ff=d_ff, dm_p=dm_p, dff_p=dff_p, tff=tff,
                compute_dtype=cdt)


def feed_forward_block(x, params, *, row_tile=1024):
    """x: (batch, seq, d_model); params from prepare_ffn_params()."""
    batch, seq, d_model = x.shape
    assert d_model == params["d_model"]
    dm_p, dff_p, tff = params["dm_p"], params["dff_p"], params["tff"]
    cdt = params["compute_dtype"]

    rows = batch * seq
    out_dtype = x.dtype
    f32_out = out_dtype == jnp.float32

    esz = cdt.itemsize
    osz = jnp.dtype(out_dtype).itemsize

    def vmem_est(tm_):
        # Double-buffered inputs/output + h scratch (+ f32 acc for non-f32 out).
        e = 2 * (tm_ * dm_p * esz          # x tile
                 + dm_p * tff * esz        # W1 chunk
                 + tff * dm_p * esz        # W2 chunk
                 + tff * 4 + dm_p * 4      # bias chunks (f32)
                 + tm_ * dm_p * osz)       # output tile
        e += tm_ * tff * esz               # h scratch
        if not f32_out:
            e += tm_ * dm_p * 4            # separate f32 accumulator
        return e

    # --- row-tile selection --------------------------------------------------
    tm = min(row_tile, _round_up(rows, 8))
    # v7x megacore: make sure the "parallel" rows axis has >= 2 tiles when the
    # problem is big enough (1 TC chips are unaffected apart from tiny per-step
    # overhead).
    if rows <= tm and rows >= 16:
        tm = _round_up(-(-rows // 2), 8)
    # Clamp the tile to the generation-specific VMEM budget (instead of
    # silently clamping vmem_limit_bytes below the footprint).
    budget = _vmem_budget_bytes()
    while vmem_est(tm) > budget and tm > 8:
        tm = max(8, _round_up(tm // 2, 8))

    rows_p = _round_up(rows, tm)
    grid = (rows_p // tm, dff_p // tff)

    vmem_limit = int(max(32 << 20, min(vmem_est(tm) + (4 << 20), budget)))

    # --- activations: cast + pad (unavoidable per call; weights are prestaged)
    x2d = _pad2(x.reshape(rows, d_model).astype(cdt), rows_p, dm_p)

    in_specs = [
        pl.BlockSpec((tm, dm_p), lambda i, j: (i, 0)),          # x row tile
        pl.BlockSpec((None, dm_p, tff), lambda i, j: (j, 0, 0)),  # W1 chunk
        pl.BlockSpec((1, tff), lambda i, j: (0, j)),            # b1 chunk
        pl.BlockSpec((tff, dm_p), lambda i, j: (j, 0)),         # W2 chunk
        pl.BlockSpec((1, dm_p), lambda i, j: (0, 0)),           # b2
    ]
    out_spec = pl.BlockSpec((tm, dm_p), lambda i, j: (i, 0))

    scratch = [pltpu.VMEM((tm, tff), cdt)]                      # h intermediate
    if f32_out:
        kernel = _ffn_kernel_f32out
    else:
        kernel = _ffn_kernel_acc
        scratch.append(pltpu.VMEM((tm, dm_p), jnp.float32))     # f32 accumulator

    out2d = pl.pallas_call(
        kernel,
        out_shape=jax.ShapeDtypeStruct((rows_p, dm_p), out_dtype),
        grid_spec=pltpu.PrefetchScalarGridSpec(
            num_scalar_prefetch=0,
            grid=grid,
            in_specs=in_specs,
            out_specs=out_spec,
            scratch_shapes=scratch,
        ),
        compiler_params=pltpu.CompilerParams(
            dimension_semantics=("parallel", "arbitrary"),
            vmem_limit_bytes=vmem_limit,
        ),
    )(x2d, params["w1"], params["b1"], params["w2"], params["b2"])

    return out2d[:rows, :d_model].reshape(batch, seq, d_model)


# --------------------------------- demo ------------------------------------ #

if __name__ == "__main__":
    # Small shapes consistent with the module: (batch, seq, d_model)
    batch, seq, d_model, d_ff = 2, 8, 32, 64
    key = jax.random.PRNGKey(0)
    kx, kw1, kb1, kw2, kb2 = jax.random.split(key, 5)

    x = jax.random.normal(kx, (batch, seq, d_model), dtype=jnp.float32)
    # nn.Linear(d_model, d_ff): weight (d_ff, d_model) -> stored transposed.
    w1 = jax.random.normal(kw1, (d_model, d_ff), dtype=jnp.float32) * 0.1
    b1 = jax.random.normal(kb1, (d_ff,), dtype=jnp.float32) * 0.1
    # nn.Linear(d_ff, d_model): weight (d_model, d_ff) -> stored transposed.
    w2 = jax.random.normal(kw2, (d_ff, d_model), dtype=jnp.float32) * 0.1
    b2 = jax.random.normal(kb2, (d_model,), dtype=jnp.float32) * 0.1

    # Pure-JAX reference (dropout = identity in eval mode).
    ref = jnp.maximum(x @ w1 + b1, 0.0) @ w2 + b2

    # 1) f32 compute path: exactness check (direct-into-output kernel).
    p_f32 = prepare_ffn_params(w1, b1, w2, b2, compute_dtype=jnp.float32)
    out_f32 = jax.block_until_ready(feed_forward_block(x, p_f32))
    assert out_f32.shape == (batch, seq, d_model)
    assert jnp.allclose(out_f32, ref, atol=1e-5, rtol=1e-5), \
        float(jnp.max(jnp.abs(out_f32 - ref)))

    # 2) Default optimized path: bf16 operands, f32 MXU accumulation, f32 out.
    p_bf16 = prepare_ffn_params(w1, b1, w2, b2, compute_dtype=jnp.bfloat16)
    out = jax.block_until_ready(feed_forward_block(x, p_bf16))
    assert out.shape == (batch, seq, d_model)
    assert jnp.allclose(out, ref, atol=3e-2, rtol=3e-2), \
        float(jnp.max(jnp.abs(out - ref)))

    # 3) bf16 output path (exercises the separate f32-accumulator kernel).
    out_bf = jax.block_until_ready(
        feed_forward_block(x.astype(jnp.bfloat16), p_bf16))
    assert out_bf.dtype == jnp.bfloat16
    assert jnp.allclose(out_bf.astype(jnp.float32), ref, atol=6e-2, rtol=6e-2), \
        float(jnp.max(jnp.abs(out_bf.astype(jnp.float32) - ref)))

    print("KERNEL_OK")
</pallas_src>

<mosaic_0001>
module attributes {stable_mosaic.version = 11 : i64} {
  func.func @_ffn_kernel_f32out(%arg0: i32, %arg1: i32, %arg2: memref<8x128xf32, #tpu.memory_space<vmem>>, %arg3: memref<1x128x128xf32, #tpu.memory_space<vmem>>, %arg4: memref<1x128xf32, #tpu.memory_space<vmem>>, %arg5: memref<128x128xf32, #tpu.memory_space<vmem>>, %arg6: memref<1x128xf32, #tpu.memory_space<vmem>>, %arg7: memref<8x128xf32, #tpu.memory_space<vmem>>, %arg8: memref<8x128xf32, #tpu.memory_space<vmem>>) attributes {dimension_semantics = [#tpu.dimension_semantics<parallel>, #tpu.dimension_semantics<arbitrary>], iteration_bounds = array<i64: 2, 1>, scalar_prefetch = 0 : i64, scratch_operands = 1 : i64, tpu.core_type = #tpu.core_type<tc>, window_params = [{transform_indices = @transform_0, window_bounds = array<i64: 8, 128>}, {transform_indices = @transform_1, window_bounds = array<i64: 1, 128, 128>}, {transform_indices = @transform_2, window_bounds = array<i64: 1, 128>}, {transform_indices = @transform_3, window_bounds = array<i64: 128, 128>}, {pipeline_mode = #tpu.pipeline_mode<synchronous>, transform_indices = @transform_4, window_bounds = array<i64: 1, 128>}, {transform_indices = @transform_5, window_bounds = array<i64: 8, 128>}]} {
    %c0_i32 = arith.constant 0 : i32
    %0 = arith.cmpi eq, %arg1, %c0_i32 : i32
    %1 = arith.extui %0 : i1 to i32
    %c0_i32_0 = arith.constant 0 : i32
    %2 = arith.cmpi ne, %1, %c0_i32_0 : i32
    scf.if %2 {
      %c0_19 = arith.constant 0 : index
      %c0_20 = arith.constant 0 : index
      %19 = vector.load %arg6[%c0_19, %c0_20] : memref<1x128xf32, #tpu.memory_space<vmem>>, vector<1x128xf32>
      %20 = vector.shape_cast %19 : vector<1x128xf32> to vector<1x128xf32>
      %21 = vector.broadcast %20 : vector<1x128xf32> to vector<8x128xf32>
      %c0_21 = arith.constant 0 : index
      %c0_22 = arith.constant 0 : index
      %22 = vector.load %arg7[%c0_21, %c0_22] : memref<8x128xf32, #tpu.memory_space<vmem>>, vector<8x128xf32>
      tpu.vector_store %arg7[%c0_21, %c0_22], %21 {strides = array<i32>} : memref<8x128xf32, #tpu.memory_space<vmem>>, vector<8x128xf32>,
    } else {
    }
    %c0 = arith.constant 0 : index
    %c0_1 = arith.constant 0 : index
    %3 = vector.load %arg2[%c0, %c0_1] : memref<8x128xf32, #tpu.memory_space<vmem>>, vector<8x128xf32>
    %c0_2 = arith.constant 0 : index
    %c0_3 = arith.constant 0 : index
    %c0_4 = arith.constant 0 : index
    %4 = vector.load %arg3[%c0_2, %c0_3, %c0_4] : memref<1x128x128xf32, #tpu.memory_space<vmem>>, vector<1x128x128xf32>
    %5 = vector.shape_cast %4 : vector<1x128x128xf32> to vector<128x128xf32>
    %cst = arith.constant dense<0.000000e+00> : vector<8x128xf32>
    %6 = tpu.matmul %3, %5, %cst {dimension_numbers = #tpu.dot_dimension_numbers<[1], [0], [0], [1], [0, 0, 1, 1], [], []>} : vector<8x128xf32>, vector<128x128xf32>, vector<8x128xf32> -> vector<8x128xf32>
    %c0_5 = arith.constant 0 : index
    %c0_6 = arith.constant 0 : index
    %7 = vector.load %arg4[%c0_5, %c0_6] : memref<1x128xf32, #tpu.memory_space<vmem>>, vector<1x128xf32>
    %8 = vector.broadcast %7 : vector<1x128xf32> to vector<8x128xf32>
    %9 = arith.addf %6, %8 : vector<8x128xf32>
    %cst_7 = arith.constant 0.000000e+00 : f32
    %10 = vector.broadcast %cst_7 : f32 to vector<8x128xf32>
    %11 = arith.maximumf %9, %10 : vector<8x128xf32>
    %c0_8 = arith.constant 0 : index
    %c0_9 = arith.constant 0 : index
    %12 = vector.load %arg8[%c0_8, %c0_9] : memref<8x128xf32, #tpu.memory_space<vmem>>, vector<8x128xf32>
    tpu.vector_store %arg8[%c0_8, %c0_9], %11 {strides = array<i32>} : memref<8x128xf32, #tpu.memory_space<vmem>>, vector<8x128xf32>,
    %c0_10 = arith.constant 0 : index
    %c0_11 = arith.constant 0 : index
    %13 = vector.load %arg7[%c0_10, %c0_11] : memref<8x128xf32, #tpu.memory_space<vmem>>, vector<8x128xf32>
    %c0_12 = arith.constant 0 : index
    %c0_13 = arith.constant 0 : index
    %14 = vector.load %arg8[%c0_12, %c0_13] : memref<8x128xf32, #tpu.memory_space<vmem>>, vector<8x128xf32>
    %c0_14 = arith.constant 0 : index
    %c0_15 = arith.constant 0 : index
    %15 = vector.load %arg5[%c0_14, %c0_15] : memref<128x128xf32, #tpu.memory_space<vmem>>, vector<128x128xf32>
    %cst_16 = arith.constant dense<0.000000e+00> : vector<8x128xf32>
    %16 = tpu.matmul %14, %15, %cst_16 {dimension_numbers = #tpu.dot_dimension_numbers<[1], [0], [0], [1], [0, 0, 1, 1], [], []>} : vector<8x128xf32>, vector<128x128xf32>, vector<8x128xf32> -> vector<8x128xf32>
    %17 = arith.addf %13, %16 : vector<8x128xf32>
    %c0_17 = arith.constant 0 : index
    %c0_18 = arith.constant 0 : index
    %18 = vector.load %arg7[%c0_17, %c0_18] : memref<8x128xf32, #tpu.memory_space<vmem>>, vector<8x128xf32>
    tpu.vector_store %arg7[%c0_17, %c0_18], %17 {strides = array<i32>} : memref<8x128xf32, #tpu.memory_space<vmem>>, vector<8x128xf32>,
    return
  }
  func.func @transform_0(%arg0: i32, %arg1: i32) -> (i32, i32) {
    %c0_i32 = arith.constant 0 : i32
    %c0_i32_0 = arith.constant 0 : i32
    return %arg0, %c0_i32 : i32, i32
  }
  func.func @transform_1(%arg0: i32, %arg1: i32) -> (i32, i32, i32) {
    %c0_i32 = arith.constant 0 : i32
    %c0_i32_0 = arith.constant 0 : i32
    %c0_i32_1 = arith.constant 0 : i32
    return %arg1, %c0_i32, %c0_i32_0 : i32, i32, i32
  }
  func.func @transform_2(%arg0: i32, %arg1: i32) -> (i32, i32) {
    %c0_i32 = arith.constant 0 : i32
    %c0_i32_0 = arith.constant 0 : i32
    return %c0_i32, %arg1 : i32, i32
  }
  func.func @transform_3(%arg0: i32, %arg1: i32) -> (i32, i32) {
    %c0_i32 = arith.constant 0 : i32
    %c0_i32_0 = arith.constant 0 : i32
    return %arg1, %c0_i32 : i32, i32
  }
  func.func @transform_4(%arg0: i32, %arg1: i32) -> (i32, i32) {
    %c0_i32 = arith.constant 0 : i32
    %c0_i32_0 = arith.constant 0 : i32
    %c0_i32_1 = arith.constant 0 : i32
    return %c0_i32, %c0_i32_0 : i32, i32
  }
  func.func @transform_5(%arg0: i32, %arg1: i32) -> (i32, i32) {
    %c0_i32 = arith.constant 0 : i32
    %c0_i32_0 = arith.constant 0 : i32
    return %arg0, %c0_i32 : i32, i32
  }
}

</mosaic_0001>

<llo_original>
// kernel: tpu_custom_call.1
$region0: #{tpu_custom_call.1}
  #allocation0 [shape = 'u32[]', space=smem, size = 0x4, offset = 0x4, fixed_abs, tag = 'smem constant byte address 0x4 - core index']
  #allocation1 [shape = 'u32[144,128]{1,0:T(1,128)}', space=vmem, size = 0x12000, scoped, tag = 'internal scratch']
  #allocation2 [shape = 'f32[8,128]{1,0:T(8,128)}', space=vmem, size = 0x1000, scoped, tag = 'scratch operand']
  %s0 = inlined_call_operand.hbm [shape: f32[16,128], index: 0, kind: input, shape index: {}]
  %s1 = inlined_call_operand.hbm [shape: f32[1,128,128], index: 1, kind: input, shape index: {}]
  %s2 = inlined_call_operand.vmem [shape: f32[1,128], index: 2, kind: input, shape index: {}]
  %s3 = inlined_call_operand.hbm [shape: f32[128,128], index: 3, kind: input, shape index: {}]
  %s4 = inlined_call_operand.vmem [shape: f32[1,128], index: 4, kind: input, shape index: {}]
  %s5 = inlined_call_operand.hbm [shape: f32[16,128], index: 5, kind: output, shape index: {}]
  %s6 = sld [smem:[#allocation0]]
  $region69: #{tpu_custom_call.1} parent=0
    _
  %s8 = ssub.s32 1, %s6
  %s9 = scalar_select 0, %s8, %s6
  $region1: #{tpu_custom_call.1} parent=0
    #allocation3 [shape = 'u8[8192]{0}', space=vmem, size = 0x2000, scoped, tag = 'input window, operand 0']
    #allocation4 [shape = 's32[2]{0}', space=sflag, size = 0x8, scoped, tag = 'scoped memory for tpu_custom_call.1']
    #allocation5 [shape = 's32[2]{0}', space=sflag, size = 0x8, scoped, tag = 'scoped memory for tpu_custom_call.1']
    #allocation6 [shape = 'u8[65536]{0}', space=vmem, size = 0x10000, scoped, tag = 'input window, operand 1, single buffered']
    #allocation7 [shape = 's32[1]{0}', space=sflag, size = 0x4, scoped, tag = 'scoped memory for tpu_custom_call.1']
    #allocation8 [shape = 'u8[65536]{0}', space=vmem, size = 0x10000, scoped, tag = 'input window, operand 3, single buffered']
    #allocation9 [shape = 'u8[8192]{0}', space=vmem, size = 0x2000, scoped, tag = 'output window, operand 0']
    %10 = vsyncpa [#allocation4], 0
    %s11 = scalar_lea.sflag [#allocation4], 1
    %12 = vsyncpa %s11, 0
    %13 = vsyncpa [#allocation7], 0
    %14 = vsyncpa [#allocation5], 0
    %s15 = scalar_lea.sflag [#allocation5], 1
    %16 = vsyncpa %s15, 0
    loop: start=0, step=1, limit=4
    $region2: #{tpu_custom_call.1} parent=1 // loop_pre_header
      _
    $region3: #{tpu_custom_call.1} parent=1 // loop_header
      %s18 = sphi 0, %s22
      %p19 = scmp.ge.s32.totalorder %s18, 4
      %s25 = sphi 0, %s37
      %s26 = sphi 0, %s33
      %s27 = sphi 0, %s25
      %s28 = sphi 0, %s26
      %s29 = sphi 0, %s27
      %s30 = sphi 0, %s28
      %s40 = sphi 0, %s42
      %s43 = sphi 0, %s40
      %s44 = sphi 0, %s43
      %s60 = sphi 0, %s44
      %s66 = sphi 0, %s68
      %s69 = sphi 0, %s66
      %s70 = sphi 0, %s69
      %s86 = sphi 0, %s70
      %s92 = sphi 0, %s94
      %s95 = sphi 0, %s92
      %s96 = sphi 0, %s95
      %s112 = sphi 0, %s96
      %s118 = sphi 0, %s120
      %s121 = sphi 0, %s118
      %s122 = sphi 0, %s121
      %s138 = sphi 0, %s122
      %s142 = sphi 0, %s142
      %s144 = sphi 0, %s142
      %s145 = sphi 0, %s144
      %s159 = sphi 0, %s145
      %s165 = sphi 0, %s167
      %s168 = sphi 0, %s165
      %s169 = sphi 0, %s168
      %s185 = sphi 0, %s169
    $region4: #{tpu_custom_call.1} parent=1 // loop_header_branch
      %21 = sbr.rel (%p19) target = $region8
    $region5: #{tpu_custom_call.1} parent=1 // loop_body
      %s23 = ssub.s32 %s18, 1
      %s24 = ssub.s32 %s18, 2
      %s31 = sadd.s32 1, %s26
      %p32 = scmp.ge.s32.totalorder %s31, 1
      %s33 = scalar_select %p32, 0, %s31
      %s34 = sadd.s32 1, %s25
      %s35 = scalar_select %p32, %s34, %s25
      %p36 = scmp.ge.s32.totalorder %s35, 2
      %s37 = scalar_select %p36, 0, %s35
      %s38 = ssub.s32 %s25, %s37
      %p39 = scmp.eq.s32.totalorder %s38, 0
      %s41 = sadd.s32 %s40, 1
      %s42 = scalar_select %p39, %s40, %s41
      %p45 = pneg %p39
      %p46 = scmp.eq.s32.totalorder %s18, 1
      %p47 = por %p45, %p46
      %p48 = scmp.ne.s32.totalorder %s40, %s43
      %p49 = scmp.eq.s32.totalorder %s18, 0
      %p50 = por %p48, %p49
      %p51 = scmp.ne.s32.totalorder %s40, %s43
      %p52 = scmp.eq.s32.totalorder %s23, 1
      %p53 = por %p51, %p52
      %p54 = scmp.ne.s32.totalorder %s43, %s44
      %p55 = scmp.eq.s32.totalorder %s23, 0
      %p56 = por %p54, %p55
      %p57 = scmp.ne.s32.totalorder %s43, %s44
      %p58 = scmp.eq.s32.totalorder %s24, 1
      %p59 = por %p57, %p58
      %p61 = scmp.ne.s32.totalorder %s44, %s60
      %p62 = scmp.eq.s32.totalorder %s24, 0
      %p63 = por %p61, %p62
      %s64 = ssub.s32 %s26, %s33
      %p65 = scmp.eq.s32.totalorder %s64, 0
      %s67 = sadd.s32 %s66, 1
      %s68 = scalar_select %p65, %s66, %s67
      %p71 = pneg %p65
      %p72 = scmp.eq.s32.totalorder %s18, 1
      %p73 = por %p71, %p72
      %p74 = scmp.ne.s32.totalorder %s66, %s69
      %p75 = scmp.eq.s32.totalorder %s18, 0
      %p76 = por %p74, %p75
      %p77 = scmp.ne.s32.totalorder %s66, %s69
      %p78 = scmp.eq.s32.totalorder %s23, 1
      %p79 = por %p77, %p78
      %p80 = scmp.ne.s32.totalorder %s69, %s70
      %p81 = scmp.eq.s32.totalorder %s23, 0
      %p82 = por %p80, %p81
      %p83 = scmp.ne.s32.totalorder %s69, %s70
      %p84 = scmp.eq.s32.totalorder %s24, 1
      %p85 = por %p83, %p84
      %p87 = scmp.ne.s32.totalorder %s70, %s86
      %p88 = scmp.eq.s32.totalorder %s24, 0
      %p89 = por %p87, %p88
      %s90 = ssub.s32 %s26, %s33
      %p91 = scmp.eq.s32.totalorder %s90, 0
      %s93 = sadd.s32 %s92, 1
      %s94 = scalar_select %p91, %s92, %s93
      %p97 = pneg %p91
      %p98 = scmp.eq.s32.totalorder %s18, 1
      %p99 = por %p97, %p98
      %p100 = scmp.ne.s32.totalorder %s92, %s95
      %p101 = scmp.eq.s32.totalorder %s18, 0
      %p102 = por %p100, %p101
      %p103 = scmp.ne.s32.totalorder %s92, %s95
      %p104 = scmp.eq.s32.totalorder %s23, 1
      %p105 = por %p103, %p104
      %p106 = scmp.ne.s32.totalorder %s95, %s96
      %p107 = scmp.eq.s32.totalorder %s23, 0
      %p108 = por %p106, %p107
      %p109 = scmp.ne.s32.totalorder %s95, %s96
      %p110 = scmp.eq.s32.totalorder %s24, 1
      %p111 = por %p109, %p110
      %p113 = scmp.ne.s32.totalorder %s96, %s112
      %p114 = scmp.eq.s32.totalorder %s24, 0
      %p115 = por %p113, %p114
      %s116 = ssub.s32 %s26, %s33
      %p117 = scmp.eq.s32.totalorder %s116, 0
      %s119 = sadd.s32 %s118, 1
      %s120 = scalar_select %p117, %s118, %s119
      %p123 = pneg %p117
      %p124 = scmp.eq.s32.totalorder %s18, 1
      %p125 = por %p123, %p124
      %p126 = scmp.ne.s32.totalorder %s118, %s121
      %p127 = scmp.eq.s32.totalorder %s18, 0
      %p128 = por %p126, %p127
      %p129 = scmp.ne.s32.totalorder %s118, %s121
      %p130 = scmp.eq.s32.totalorder %s23, 1
      %p131 = por %p129, %p130
      %p132 = scmp.ne.s32.totalorder %s121, %s122
      %p133 = scmp.eq.s32.totalorder %s23, 0
      %p134 = por %p132, %p133
      %p135 = scmp.ne.s32.totalorder %s121, %s122
      %p136 = scmp.eq.s32.totalorder %s24, 1
      %p137 = por %p135, %p136
      %p139 = scmp.ne.s32.totalorder %s122, %s138
      %p140 = scmp.eq.s32.totalorder %s24, 0
      %p141 = por %p139, %p140
      %s143 = sadd.s32 %s142, 1
      %p146 = scmp.eq.s32.totalorder %s18, 1
      %p147 = scmp.ne.s32.totalorder %s142, %s144
      %p148 = scmp.eq.s32.totalorder %s18, 0
      %p149 = por %p147, %p148
      %p150 = scmp.ne.s32.totalorder %s142, %s144
      %p151 = scmp.eq.s32.totalorder %s23, 1
      %p152 = por %p150, %p151
      %p153 = scmp.ne.s32.totalorder %s144, %s145
      %p154 = scmp.eq.s32.totalorder %s23, 0
      %p155 = por %p153, %p154
      %p156 = scmp.ne.s32.totalorder %s144, %s145
      %p157 = scmp.eq.s32.totalorder %s24, 1
      %p158 = por %p156, %p157
      %p160 = scmp.ne.s32.totalorder %s145, %s159
      %p161 = scmp.eq.s32.totalorder %s24, 0
      %p162 = por %p160, %p161
      %s163 = ssub.s32 %s25, %s37
      %p164 = scmp.eq.s32.totalorder %s163, 0
      %s166 = sadd.s32 %s165, 1
      %s167 = scalar_select %p164, %s165, %s166
      %p170 = pneg %p164
      %p171 = scmp.eq.s32.totalorder %s18, 1
      %p172 = por %p170, %p171
      %p173 = scmp.ne.s32.totalorder %s165, %s168
      %p174 = scmp.eq.s32.totalorder %s18, 0
      %p175 = por %p173, %p174
      %p176 = scmp.ne.s32.totalorder %s165, %s168
      %p177 = scmp.eq.s32.totalorder %s23, 1
      %p178 = por %p176, %p177
      %p179 = scmp.ne.s32.totalorder %s168, %s169
      %p180 = scmp.eq.s32.totalorder %s23, 0
      %p181 = por %p179, %p180
      %p182 = scmp.ne.s32.totalorder %s168, %s169
      %p183 = scmp.eq.s32.totalorder %s24, 1
      %p184 = por %p182, %p183
      %p186 = scmp.ne.s32.totalorder %s169, %s185
      %p187 = scmp.eq.s32.totalorder %s24, 0
      %p188 = por %p186, %p187
      %p189 = scmp.le.s32.totalorder 1, %s18
      %p190 = scmp.lt.s32.totalorder %s18, 3
      %p191 = pnand %p189, %p190
      %p192 = pneg %p191
      // Predicated region
      $region9: #{tpu_custom_call.1} parent=5 // pred_check
        _
      $region10: #{tpu_custom_call.1} parent=5 // pred_check_branch
        %194 = sbr.rel (%p191) target = $region12
      $region11: #{tpu_custom_call.1} parent=5 // pred_region
        %s195 = ssub.s32 %s18, 1
        // Predicated region
        $region13: #{tpu_custom_call.1} parent=11 // pred_check
          %p196 = pneg %p82
        $region14: #{tpu_custom_call.1} parent=11 // pred_check_branch
          %198 = sbr.rel (%p196) target = $region16
        $region15: #{tpu_custom_call.1} parent=11 // pred_region
          %s200 = ssub.s32 2048, 2048
          %201 = vsyncadd [#allocation7], %s200
          %s202 = smul.addr %s28, 16
          %s203 = smul.addr %s202, 128
          %s204 = scalar_lea.hbm %s1, %s203
          %s205 = sshll.u32 [#allocation6], 4
          %s206 = int_to_ptr.vmem [resolvable:$true] %s205
          %211 = dma.hbm_to_vmem [thread:$0]  %s204, 2048, %s206, [#allocation7], 128, 128, 8
        $region16: #{tpu_custom_call.1} parent=11 // pred_fallthru
          _
        // Predicated region
        $region17: #{tpu_custom_call.1} parent=11 // pred_check
          %p212 = pneg %p108
        $region18: #{tpu_custom_call.1} parent=11 // pred_check_branch
          %214 = sbr.rel (%p212) target = $region20
        $region19: #{tpu_custom_call.1} parent=11 // pred_region
          %p215 = scmp.lt.s32.totalorder %s28, 0
          %s216 = scalar_select %p215, %s28, 0
          %s217 = scalar_lea.vmem %s2, %s216
        $region20: #{tpu_custom_call.1} parent=11 // pred_fallthru
          _
        // Predicated region
        $region21: #{tpu_custom_call.1} parent=11 // pred_check
          %p218 = pneg %p134
        $region22: #{tpu_custom_call.1} parent=11 // pred_check_branch
          %220 = sbr.rel (%p218) target = $region24
        $region23: #{tpu_custom_call.1} parent=11 // pred_region
          %s221 = smul.u32 16, %s28
          %s223 = ssub.s32 2048, 2048
          %224 = vsyncadd [#allocation7], %s223
          %s225 = smul.addr %s221, 128
          %s226 = scalar_lea.hbm %s3, %s225
          %s227 = sshll.u32 [#allocation8], 4
          %s228 = int_to_ptr.vmem [resolvable:$true] %s227
          %233 = dma.hbm_to_vmem [thread:$0]  %s226, 2048, %s228, [#allocation7], 128, 128, 8
        $region24: #{tpu_custom_call.1} parent=11 // pred_fallthru
          _
        // Predicated region
        $region25: #{tpu_custom_call.1} parent=11 // pred_check
          %p234 = pneg %p155
        $region26: #{tpu_custom_call.1} parent=11 // pred_check_branch
          %236 = sbr.rel (%p234) target = $region28
        $region27: #{tpu_custom_call.1} parent=11 // pred_region
          _
        $region28: #{tpu_custom_call.1} parent=11 // pred_fallthru
          _
      $region12: #{tpu_custom_call.1} parent=5 // pred_fallthru
        _
      %p237 = scmp.lt.s32.totalorder %s18, 2
      // Predicated region
      $region29: #{tpu_custom_call.1} parent=5 // pred_check
        %p238 = pneg %p237
      $region30: #{tpu_custom_call.1} parent=5 // pred_check_branch
        %240 = sbr.rel (%p238) target = $region32
      $region31: #{tpu_custom_call.1} parent=5 // pred_region
        // Predicated region
        $region33: #{tpu_custom_call.1} parent=31 // pred_check
          %p241 = pneg %p50
        $region34: #{tpu_custom_call.1} parent=31 // pred_check_branch
          %243 = sbr.rel (%p241) target = $region36
        $region35: #{tpu_custom_call.1} parent=31 // pred_region
          %s244 = sand.u32 %s40, 1
          %s245 = scalar_lea.sflag [#allocation4], %s244
          %s246 = sand.u32 %s40, 1
          %s247 = smul.addr %s246, 8
          %s248 = scalar_lea.vmem [#allocation3], %s247
          %s250 = ssub.s32 128, 128
          %251 = vsyncadd %s245, %s250
          %s252 = smul.addr %s25, 128
          %s253 = scalar_lea.hbm %s0, %s252
          %s255 = sshll.u32 %s248, 4
          %s256 = int_to_ptr.vmem [resolvable:$true] %s255
          %258 = dma.hbm_to_vmem [thread:$0]  %s253, 128, %s256, %s245
        $region36: #{tpu_custom_call.1} parent=31 // pred_fallthru
          _
      $region32: #{tpu_custom_call.1} parent=5 // pred_fallthru
        _
      %p259 = scmp.le.s32.totalorder 1, %s18
      %p260 = scmp.lt.s32.totalorder %s18, 3
      %p261 = pnand %p259, %p260
      %p262 = pneg %p261
      // Predicated region
      $region37: #{tpu_custom_call.1} parent=5 // pred_check
        _
      $region38: #{tpu_custom_call.1} parent=5 // pred_check_branch
        %264 = sbr.rel (%p261) target = $region40
      $region39: #{tpu_custom_call.1} parent=5 // pred_region
        %s265 = ssub.s32 %s18, 1
        %s266 = sand.u32 %s43, 1
        %s267 = scalar_lea.sflag [#allocation4], %s266
        %s268 = sand.u32 %s43, 1
        %s269 = smul.addr %s268, 8
        %s270 = scalar_lea.vmem [#allocation3], %s269
        // Predicated region
        $region41: #{tpu_custom_call.1} parent=39 // pred_check
          %p271 = pneg %p56
        $region42: #{tpu_custom_call.1} parent=39 // pred_check_branch
          %273 = sbr.rel (%p271) target = $region44
        $region43: #{tpu_custom_call.1} parent=39 // pred_region
          %274 = dma.done %s267, 128
        $region44: #{tpu_custom_call.1} parent=39 // pred_fallthru
          _
        // Predicated region
        $region45: #{tpu_custom_call.1} parent=39 // pred_check
          %p275 = pneg %p82
        $region46: #{tpu_custom_call.1} parent=39 // pred_check_branch
          %277 = sbr.rel (%p275) target = $region48
        $region47: #{tpu_custom_call.1} parent=39 // pred_region
          %278 = dma.done [#allocation7], 2048
        $region48: #{tpu_custom_call.1} parent=39 // pred_fallthru
          _
        // Predicated region
        $region49: #{tpu_custom_call.1} parent=39 // pred_check
          %p279 = pneg %p134
        $region50: #{tpu_custom_call.1} parent=39 // pred_check_branch
          %281 = sbr.rel (%p279) target = $region52
        $region51: #{tpu_custom_call.1} parent=39 // pred_region
          %282 = dma.done [#allocation7], 2048
        $region52: #{tpu_custom_call.1} parent=39 // pred_fallthru
          _
        %s283 = sand.u32 %s43, 1
        %s284 = scalar_lea.sflag [#allocation4], %s283
        %s285 = sand.u32 %s43, 1
        %s286 = smul.addr %s285, 8
        %s287 = scalar_lea.vmem [#allocation3], %s286
        %p288 = pneg %p56
        %p289 = pneg %p53
        %p290 = pneg %p82
        %p291 = pneg %p79
        %p292 = scmp.lt.s32.totalorder %s28, 0
        %s293 = scalar_select %p292, %s28, 0
        %s294 = scalar_lea.vmem %s2, %s293
        %p295 = pneg %p108
        %p296 = pneg %p105
        %p297 = pneg %p134
        %p298 = pneg %p131
        %p299 = pneg %p155
        %p300 = pneg %p152
        %p301 = pneg %p181
        %p302 = pneg %p178
        %s303 = sand.u32 %s168, 1
        %s304 = scalar_lea.sflag [#allocation5], %s303
        %s305 = sand.u32 %s168, 1
        %s306 = smul.addr %s305, 8
        %s307 = scalar_lea.vmem [#allocation9], %s306
        %p308 = scmp.lt.s32.totalorder %s28, 0
        %s309 = scalar_select %p308, %s28, 0
        %s310 = scalar_lea.vmem %s2, %s309
        %s311 = smul.u32 16, %s28
        %p312 = scmp.eq.s32.totalorder %s28, 0
        // Predicated region
        $region53: #{tpu_custom_call.1} parent=39 // pred_check
          %p313 = pneg %p312
        $region54: #{tpu_custom_call.1} parent=39 // pred_check_branch
          %315 = sbr.rel (%p313) target = $region56
        $region55: #{tpu_custom_call.1} parent=39 // pred_region
          %v316 = vld [vmem:[%s4] sm:$0x1]
          %v318 = vlaneseq
          %v319 = vshrl.u32 %v318, 7
          %v320 = vsub.s32 0, %v319
          %v321 = vrot.slane %v316, %v320
          %323 = vst [vmem:[%s307] sm:$0xff] %v321
        $region56: #{tpu_custom_call.1} parent=39 // pred_fallthru
          _
        %v324 = vld [vmem:[%s270] sm:$0xff]
        %v325 = vld [vmem:[#allocation6] sm:$0xff]
        %v326 = vld [vmem:[#allocation6 + $0x8] sm:$0xff]
        %v327 = vld [vmem:[#allocation6 + $0x10] sm:$0xff]
        %v328 = vld [vmem:[#allocation6 + $0x18] sm:$0xff]
        %v329 = vld [vmem:[#allocation6 + $0x20] sm:$0xff]
        %v330 = vld [vmem:[#allocation6 + $0x28] sm:$0xff]
        %v331 = vld [vmem:[#allocation6 + $0x30] sm:$0xff]
        %v332 = vld [vmem:[#allocation6 + $0x38] sm:$0xff]
        %v333 = vld [vmem:[#allocation6 + $0x40] sm:$0xff]
        %v334 = vld [vmem:[#allocation6 + $0x48] sm:$0xff]
        %v335 = vld [vmem:[#allocation6 + $0x50] sm:$0xff]
        %v336 = vld [vmem:[#allocation6 + $0x58] sm:$0xff]
        %v337 = vld [vmem:[#allocation6 + $0x60] sm:$0xff]
        %v338 = vld [vmem:[#allocation6 + $0x68] sm:$0xff]
        %v339 = vld [vmem:[#allocation6 + $0x70] sm:$0xff]
        %v340 = vld [vmem:[#allocation6 + $0x78] sm:$0xff]
        %v341 = vld [vmem:[%s310] sm:$0x1]
        %v343 = vlaneseq
        %v344 = vshrl.u32 %v343, 7
        %v345 = vsub.s32 0, %v344
        %v346 = vrot.slane %v341, %v345
        %348 = vmatprep.subr.mxu0 0.0
        %349 = vmatpush1.msra.mxu0 %v325
        %350 = vmatprep.subr.mxu0 0.0
        %351 = vmatpush1.msra.mxu0 %v326
        %352 = vmatprep.subr.mxu0 0.0
        %353 = vmatpush1.msra.mxu0 %v327
        %354 = vmatprep.subr.mxu0 0.0
        %355 = vmatpush1.msra.mxu0 %v328
        %356 = vmatprep.subr.mxu0 0.0
        %357 = vmatpush1.msra.mxu0 %v329
        %358 = vmatprep.subr.mxu0 0.0
        %359 = vmatpush1.msra.mxu0 %v330
        %360 = vmatprep.subr.mxu0 0.0
        %361 = vmatpush1.msra.mxu0 %v331
        %362 = vmatprep.subr.mxu0 0.0
        %363 = vmatpush1.msra.mxu0 %v332
        %364 = vmatprep.subr.mxu0 0.0
        %365 = vmatpush1.msra.mxu0 %v333
        %366 = vmatprep.subr.mxu0 0.0
        %367 = vmatpush1.msra.mxu0 %v334
        %368 = vmatprep.subr.mxu0 0.0
        %369 = vmatpush1.msra.mxu0 %v335
        %370 = vmatprep.subr.mxu0 0.0
        %371 = vmatpush1.msra.mxu0 %v336
        %372 = vmatprep.subr.mxu0 0.0
        %373 = vmatpush1.msra.mxu0 %v337
        %374 = vmatprep.subr.mxu0 0.0
        %375 = vmatpush1.msra.mxu0 %v338
        %376 = vmatprep.subr.mxu0 0.0
        %377 = vmatpush1.msra.mxu0 %v339
        %378 = vmatprep.subr.mxu0 0.0
        %379 = vmatpush1.msra.mxu0 %v340
        %380 = vmatprep.subr.mxu0 0.0
        %381 = vmatpush1.msra.mxu0 0.0
        %382 = vmatprep.subr.mxu0 0.0
        %383 = vmatpush1.msra.mxu0 0.0
        %384 = vmatprep.subr.mxu0 0.0
        %385 = vmatpush1.msra.mxu0 0.0
        %386 = vmatprep.subr.mxu0 0.0
        %387 = vmatpush1.msra.mxu0 0.0
        %388 = vmatprep.subr.mxu0 0.0
        %389 = vmatpush1.msra.mxu0 0.0
        %390 = vmatprep.subr.mxu0 0.0
        %391 = vmatpush1.msra.mxu0 0.0
        %392 = vmatprep.subr.mxu0 0.0
        %393 = vmatpush1.msra.mxu0 0.0
        %394 = vmatprep.subr.mxu0 0.0
        %395 = vmatpush1.msra.mxu0 0.0
        %396 = vmatprep.subr.mxu0 0.0
        %397 = vmatpush1.msra.mxu0 0.0
        %398 = vmatprep.subr.mxu0 0.0
        %399 = vmatpush1.msra.mxu0 0.0
        %400 = vmatprep.subr.mxu0 0.0
        %401 = vmatpush1.msra.mxu0 0.0
        %402 = vmatprep.subr.mxu0 0.0
        %403 = vmatpush1.msra.mxu0 0.0
        %404 = vmatprep.subr.mxu0 0.0
        %405 = vmatpush1.msra.mxu0 0.0
        %406 = vmatprep.subr.mxu0 0.0
        %407 = vmatpush1.msra.mxu0 0.0
        %408 = vmatprep.subr.mxu0 0.0
        %409 = vmatpush1.msra.mxu0 0.0
        %410 = vmatprep.subr.mxu0 0.0
        %411 = vmatpush1.msra.mxu0 0.0
        %412 = vmatprep.mubr.f32.mxu0 0.0
        %413 = vmatmul.mubr.f32.gmra.mrb[0].mxu0 %v324
        %v414 = vpop.f32.mrb[0].mxu0
        %v415 = vadd.f32 %v346, %v414
        %v416 = vpop.f32.mrb[0].mxu0
        %417 = vdwg.mxu0
        %v418 = vmax.f32 %v415, 0.0
        %419 = vst [vmem:[#allocation2] sm:$0xff] %v418
        %v420 = vld [vmem:[%s307] sm:$0xff]
        %v421 = vld [vmem:[#allocation2] sm:$0xff]
        %v422 = vld [vmem:[#allocation8] sm:$0xff]
        %v423 = vld [vmem:[#allocation8 + $0x8] sm:$0xff]
        %v424 = vld [vmem:[#allocation8 + $0x10] sm:$0xff]
        %v425 = vld [vmem:[#allocation8 + $0x18] sm:$0xff]
        %v426 = vld [vmem:[#allocation8 + $0x20] sm:$0xff]
        %v427 = vld [vmem:[#allocation8 + $0x28] sm:$0xff]
        %v428 = vld [vmem:[#allocation8 + $0x30] sm:$0xff]
        %v429 = vld [vmem:[#allocation8 + $0x38] sm:$0xff]
        %v430 = vld [vmem:[#allocation8 + $0x40] sm:$0xff]
        %v431 = vld [vmem:[#allocation8 + $0x48] sm:$0xff]
        %v432 = vld [vmem:[#allocation8 + $0x50] sm:$0xff]
        %v433 = vld [vmem:[#allocation8 + $0x58] sm:$0xff]
        %v434 = vld [vmem:[#allocation8 + $0x60] sm:$0xff]
        %v435 = vld [vmem:[#allocation8 + $0x68] sm:$0xff]
        %v436 = vld [vmem:[#allocation8 + $0x70] sm:$0xff]
        %v437 = vld [vmem:[#allocation8 + $0x78] sm:$0xff]
        %438 = vmatprep.subr.mxu0 0.0
        %439 = vmatpush1.msra.mxu0 %v422
        %440 = vmatprep.subr.mxu0 0.0
        %441 = vmatpush1.msra.mxu0 %v423
        %442 = vmatprep.subr.mxu0 0.0
        %443 = vmatpush1.msra.mxu0 %v424
        %444 = vmatprep.subr.mxu0 0.0
        %445 = vmatpush1.msra.mxu0 %v425
        %446 = vmatprep.subr.mxu0 0.0
        %447 = vmatpush1.msra.mxu0 %v426
        %448 = vmatprep.subr.mxu0 0.0
        %449 = vmatpush1.msra.mxu0 %v427
        %450 = vmatprep.subr.mxu0 0.0
        %451 = vmatpush1.msra.mxu0 %v428
        %452 = vmatprep.subr.mxu0 0.0
        %453 = vmatpush1.msra.mxu0 %v429
        %454 = vmatprep.subr.mxu0 0.0
        %455 = vmatpush1.msra.mxu0 %v430
        %456 = vmatprep.subr.mxu0 0.0
        %457 = vmatpush1.msra.mxu0 %v431
        %458 = vmatprep.subr.mxu0 0.0
        %459 = vmatpush1.msra.mxu0 %v432
        %460 = vmatprep.subr.mxu0 0.0
        %461 = vmatpush1.msra.mxu0 %v433
        %462 = vmatprep.subr.mxu0 0.0
        %463 = vmatpush1.msra.mxu0 %v434
        %464 = vmatprep.subr.mxu0 0.0
        %465 = vmatpush1.msra.mxu0 %v435
        %466 = vmatprep.subr.mxu0 0.0
        %467 = vmatpush1.msra.mxu0 %v436
        %468 = vmatprep.subr.mxu0 0.0
        %469 = vmatpush1.msra.mxu0 %v437
        %470 = vmatprep.subr.mxu0 0.0
        %471 = vmatpush1.msra.mxu0 0.0
        %472 = vmatprep.subr.mxu0 0.0
        %473 = vmatpush1.msra.mxu0 0.0
        %474 = vmatprep.subr.mxu0 0.0
        %475 = vmatpush1.msra.mxu0 0.0
        %476 = vmatprep.subr.mxu0 0.0
        %477 = vmatpush1.msra.mxu0 0.0
        %478 = vmatprep.subr.mxu0 0.0
        %479 = vmatpush1.msra.mxu0 0.0
        %480 = vmatprep.subr.mxu0 0.0
        %481 = vmatpush1.msra.mxu0 0.0
        %482 = vmatprep.subr.mxu0 0.0
        %483 = vmatpush1.msra.mxu0 0.0
        %484 = vmatprep.subr.mxu0 0.0
        %485 = vmatpush1.msra.mxu0 0.0
        %486 = vmatprep.subr.mxu0 0.0
        %487 = vmatpush1.msra.mxu0 0.0
        %488 = vmatprep.subr.mxu0 0.0
        %489 = vmatpush1.msra.mxu0 0.0
        %490 = vmatprep.subr.mxu0 0.0
        %491 = vmatpush1.msra.mxu0 0.0
        %492 = vmatprep.subr.mxu0 0.0
        %493 = vmatpush1.msra.mxu0 0.0
        %494 = vmatprep.subr.mxu0 0.0
        %495 = vmatpush1.msra.mxu0 0.0
        %496 = vmatprep.subr.mxu0 0.0
        %497 = vmatpush1.msra.mxu0 0.0
        %498 = vmatprep.subr.mxu0 0.0
        %499 = vmatpush1.msra.mxu0 0.0
        %500 = vmatprep.subr.mxu0 0.0
        %501 = vmatpush1.msra.mxu0 0.0
        %502 = vmatprep.mubr.f32.mxu0 0.0
        %503 = vmatmul.mubr.f32.gmra.mrb[0].mxu0 %v421
        %v504 = vpop.f32.mrb[0].mxu0
        %v505 = vadd.f32 0.0, %v504
        %v506 = vpop.f32.mrb[0].mxu0
        %507 = vdwg.mxu0
        %v508 = vadd.f32 %v420, %v505
        %509 = vst [vmem:[%s307] sm:$0xff] %v508
        %s510 = sand.u32 %s168, 1
        %s511 = scalar_lea.sflag [#allocation5], %s510
        %s512 = sand.u32 %s168, 1
        %s513 = smul.addr %s512, 8
        %s514 = scalar_lea.vmem [#allocation9], %s513
        // Predicated region
        $region57: #{tpu_custom_call.1} parent=39 // pred_check
          %p515 = pneg %p178
        $region58: #{tpu_custom_call.1} parent=39 // pred_check_branch
          %517 = sbr.rel (%p515) target = $region60
        $region59: #{tpu_custom_call.1} parent=39 // pred_region
          %s519 = ssub.s32 128, 128
          %520 = vsyncadd %s511, %s519
          %s521 = smul.addr %s27, 128
          %s522 = scalar_lea.hbm %s5, %s521
          %s524 = sshll.u32 %s514, 4
          %s525 = int_to_ptr.vmem [resolvable:$true] %s524
          %527 = dma.vmem_to_hbm [thread:$0]  %s525, 128, %s522, %s511
        $region60: #{tpu_custom_call.1} parent=39 // pred_fallthru
          _
      $region40: #{tpu_custom_call.1} parent=5 // pred_fallthru
        _
      %p528 = scmp.le.s32.totalorder 2, %s18
      // Predicated region
      $region61: #{tpu_custom_call.1} parent=5 // pred_check
        %p529 = pneg %p528
      $region62: #{tpu_custom_call.1} parent=5 // pred_check_branch
        %531 = sbr.rel (%p529) target = $region64
      $region63: #{tpu_custom_call.1} parent=5 // pred_region
        %s532 = ssub.s32 %s18, 2
        // Predicated region
        $region65: #{tpu_custom_call.1} parent=63 // pred_check
          %p533 = pneg %p184
        $region66: #{tpu_custom_call.1} parent=63 // pred_check_branch
          %535 = sbr.rel (%p533) target = $region68
        $region67: #{tpu_custom_call.1} parent=63 // pred_region
          %s536 = sand.u32 %s169, 1
          %s537 = scalar_lea.sflag [#allocation5], %s536
          %s538 = sand.u32 %s169, 1
          %s539 = smul.addr %s538, 8
          %s540 = scalar_lea.vmem [#allocation9], %s539
          %541 = dma.done %s537, 128
        $region68: #{tpu_custom_call.1} parent=63 // pred_fallthru
          _
      $region64: #{tpu_custom_call.1} parent=5 // pred_fallthru
        _
    $region6: #{tpu_custom_call.1} parent=1 // loop_footer
      %s22 = sadd.s32 1, %s18
    $region7: #{tpu_custom_call.1} parent=1 // loop_footer_branch
      %17 = sbr.rel target = $region3
    $region8: #{tpu_custom_call.1} parent=1 // loop_exit
      _
    %542 = vsyncpa [#allocation4], 1
    %s543 = scalar_lea.sflag [#allocation4], 1
    %544 = vsyncpa %s543, 1
    %545 = vsyncpa [#allocation7], 1
    %546 = vsyncpa [#allocation5], 1
    %s547 = scalar_lea.sflag [#allocation5], 1
    %548 = vsyncpa %s547, 1

</llo_original>
